<compile_context>
chip_gen: v5e
topology: v5e:2x2
jax: 0.10.0
libtpu: 0.0.40
codegen_flags: <defaults>
</compile_context>

<pallas_src>
import jax
import jax.numpy as jnp
from jax.experimental import pallas as pl
from jax.experimental.pallas import tpu as pltpu


def _ffn_kernel(x_ref, w1_ref, b1_ref, w2_ref, b2_ref, o_ref):
    # x_ref:  (tm, dim)      current row tile (streamed, double-buffered)
    # w1_ref: (dim, hidden)  full weight (resident, single-buffered)
    # b1_ref: (1, hidden)
    # w2_ref: (hidden, dim)
    # b2_ref: (1, dim)
    # o_ref:  (tm, dim)

    # Linear 1 on the MXU in native input dtype, f32 accumulation.
    h = jnp.dot(x_ref[...], w1_ref[...], preferred_element_type=jnp.float32)
    h = h + b1_ref[...].astype(jnp.float32)

    # Exact GELU (erf-based, matches torch.nn.GELU default), computed in f32.
    h = 0.5 * h * (1.0 + jax.lax.erf(h * jnp.float32(0.7071067811865476)))

    # Linear 2: cast the f32 activation to the weight dtype (no-op for f32 weights,
    # native bf16 MXU path for bf16 weights), accumulate in f32.
    o = jnp.dot(h.astype(w2_ref.dtype), w2_ref[...], preferred_element_type=jnp.float32)
    o = o + b2_ref[...].astype(jnp.float32)

    o_ref[...] = o.astype(o_ref.dtype)


def _round_up(x, m):
    return (x + m - 1) // m * m


def feedforward_pallas(x, w1, b1, w2, b2, *, tm=256, vmem_limit_bytes=48 << 20):
    """x: (B, N, dim); w1: (dim, hidden); b1: (hidden,); w2: (hidden, dim); b2: (dim,)."""
    B, N, dim = x.shape
    hidden = w1.shape[1]
    M = B * N

    # Large row tile for MXU utilization, but never larger than the (8-padded) row count.
    tm_eff = max(8, min(tm, _round_up(M, 8)))
    M_pad = _round_up(M, tm_eff)

    x2d = x.reshape(M, dim)
    if M_pad != M:
        x2d = jnp.pad(x2d, ((0, M_pad - M), (0, 0)))
    b1_2d = b1.reshape(1, hidden)
    b2_2d = b2.reshape(1, dim)

    grid = (M_pad // tm_eff,)

    def _build_in_specs(single_buffer_weights):
        if single_buffer_weights:
            # Resident blocks never change -> keep a single VMEM copy (halves weight VMEM).
            def resident(shape):
                return pl.BlockSpec(shape, lambda i: (0, 0),
                                    pipeline_mode=pl.Buffered(1))
        else:
            def resident(shape):
                return pl.BlockSpec(shape, lambda i: (0, 0))
        return [
            pl.BlockSpec((tm_eff, dim), lambda i: (i, 0)),   # x rows (streamed)
            resident((dim, hidden)),                         # W1
            resident((1, hidden)),                           # b1
            resident((hidden, dim)),                         # W2
            resident((1, dim)),                              # b2
        ]

    def _run(single_buffer_weights):
        return pl.pallas_call(
            _ffn_kernel,
            out_shape=jax.ShapeDtypeStruct((M_pad, dim), x.dtype),
            grid_spec=pltpu.PrefetchScalarGridSpec(
                num_scalar_prefetch=0,
                grid=grid,
                in_specs=_build_in_specs(single_buffer_weights),
                out_specs=pl.BlockSpec((tm_eff, dim), lambda i: (i, 0)),
            ),
            compiler_params=pltpu.CompilerParams(
                dimension_semantics=("parallel",),
                vmem_limit_bytes=vmem_limit_bytes),
        )(x2d, w1, b1_2d, w2, b2_2d)

    try:
        out2d = _run(True)
    except Exception:
        # Fallback for jax versions without BlockSpec(pipeline_mode=...) / pl.Buffered.
        out2d = _run(False)

    if M_pad != M:
        out2d = out2d[:M]
    return out2d.reshape(B, N, dim)

    # TODO(synk): for very large hidden on v5e's 16 MiB default scoped VMEM, add a
    # hidden-tiled ("arbitrary") grid axis with an f32 accumulator scratch instead of
    # keeping both full weights resident.


def _init_linear(key, fan_in, fan_out, dtype=jnp.float32):
    # Deterministic init mimicking torch.nn.Linear default: U(-1/sqrt(fan_in), 1/sqrt(fan_in))
    kw, kb = jax.random.split(key)
    bound = 1.0 / jnp.sqrt(jnp.float32(fan_in))
    w = jax.random.uniform(kw, (fan_in, fan_out), dtype, minval=-bound, maxval=bound)
    b = jax.random.uniform(kb, (fan_out,), dtype, minval=-bound, maxval=bound)
    return w, b


def _reference(x, w1, b1, w2, b2):
    h = x @ w1 + b1
    h = 0.5 * h * (1.0 + jax.lax.erf(h / jnp.sqrt(2.0)))
    return h @ w2 + b2


if __name__ == "__main__":
    B, N, dim, hidden_dim = 2, 8, 32, 64

    key = jax.random.PRNGKey(0)
    kx, k1, k2, kx2 = jax.random.split(key, 4)

    x = jax.random.normal(kx, (B, N, dim), jnp.float32)
    w1, b1 = _init_linear(k1, dim, hidden_dim)
    w2, b2 = _init_linear(k2, hidden_dim, dim)

    out = feedforward_pallas(x, w1, b1, w2, b2)
    out = jax.block_until_ready(out)

    ref = _reference(x, w1, b1, w2, b2)
    assert out.shape == (B, N, dim)
    assert jnp.allclose(out, ref, atol=1e-5, rtol=1e-5), "mismatch vs reference"

    # Ragged row-count path (M not a multiple of the row tile): pad + slice.
    x_ragged = jax.random.normal(kx2, (1, 13, dim), jnp.float32)
    out_r = jax.block_until_ready(feedforward_pallas(x_ragged, w1, b1, w2, b2))
    ref_r = _reference(x_ragged, w1, b1, w2, b2)
    assert out_r.shape == (1, 13, dim)
    assert jnp.allclose(out_r, ref_r, atol=1e-5, rtol=1e-5), "ragged mismatch vs reference"

    print("KERNEL_OK")
</pallas_src>

<mosaic_0001>
module attributes {stable_mosaic.version = 11 : i64} {
  func.func @_ffn_kernel(%arg0: i32, %arg1: memref<16x32xf32, #tpu.memory_space<vmem>>, %arg2: memref<32x64xf32, #tpu.memory_space<vmem>>, %arg3: memref<1x64xf32, #tpu.memory_space<vmem>>, %arg4: memref<64x32xf32, #tpu.memory_space<vmem>>, %arg5: memref<1x32xf32, #tpu.memory_space<vmem>>, %arg6: memref<16x32xf32, #tpu.memory_space<vmem>>) attributes {dimension_semantics = [#tpu.dimension_semantics<parallel>], iteration_bounds = array<i64: 1>, scalar_prefetch = 0 : i64, scratch_operands = 0 : i64, tpu.core_type = #tpu.core_type<tc>, window_params = [{transform_indices = @transform_0, window_bounds = array<i64: 16, 32>}, {pipeline_mode = #tpu.pipeline_mode<synchronous>, transform_indices = @transform_1, window_bounds = array<i64: 32, 64>}, {pipeline_mode = #tpu.pipeline_mode<synchronous>, transform_indices = @transform_2, window_bounds = array<i64: 1, 64>}, {pipeline_mode = #tpu.pipeline_mode<synchronous>, transform_indices = @transform_3, window_bounds = array<i64: 64, 32>}, {pipeline_mode = #tpu.pipeline_mode<synchronous>, transform_indices = @transform_4, window_bounds = array<i64: 1, 32>}, {transform_indices = @transform_5, window_bounds = array<i64: 16, 32>}]} {
    %c0 = arith.constant 0 : index
    %c0_0 = arith.constant 0 : index
    %0 = vector.load %arg1[%c0, %c0_0] : memref<16x32xf32, #tpu.memory_space<vmem>>, vector<16x32xf32>
    %c0_1 = arith.constant 0 : index
    %c0_2 = arith.constant 0 : index
    %1 = vector.load %arg2[%c0_1, %c0_2] : memref<32x64xf32, #tpu.memory_space<vmem>>, vector<32x64xf32>
    %cst = arith.constant dense<0.000000e+00> : vector<16x64xf32>
    %2 = tpu.matmul %0, %1, %cst {dimension_numbers = #tpu.dot_dimension_numbers<[1], [0], [0], [1], [0, 0, 1, 1], [], []>} : vector<16x32xf32>, vector<32x64xf32>, vector<16x64xf32> -> vector<16x64xf32>
    %c0_3 = arith.constant 0 : index
    %c0_4 = arith.constant 0 : index
    %3 = vector.load %arg3[%c0_3, %c0_4] : memref<1x64xf32, #tpu.memory_space<vmem>>, vector<1x64xf32>
    %4 = vector.broadcast %3 : vector<1x64xf32> to vector<16x64xf32>
    %5 = arith.addf %2, %4 : vector<16x64xf32>
    %cst_5 = arith.constant 5.000000e-01 : f32
    %6 = vector.broadcast %cst_5 : f32 to vector<16x64xf32>
    %7 = arith.mulf %6, %5 : vector<16x64xf32>
    %cst_6 = arith.constant 0.707106769 : f32
    %8 = vector.broadcast %cst_6 : f32 to vector<16x64xf32>
    %9 = arith.mulf %5, %8 : vector<16x64xf32>
    %10 = math.erf %9 : vector<16x64xf32>
    %cst_7 = arith.constant 1.000000e+00 : f32
    %11 = vector.broadcast %cst_7 : f32 to vector<16x64xf32>
    %12 = arith.addf %11, %10 : vector<16x64xf32>
    %13 = arith.mulf %7, %12 : vector<16x64xf32>
    %c0_8 = arith.constant 0 : index
    %c0_9 = arith.constant 0 : index
    %14 = vector.load %arg4[%c0_8, %c0_9] : memref<64x32xf32, #tpu.memory_space<vmem>>, vector<64x32xf32>
    %cst_10 = arith.constant dense<0.000000e+00> : vector<16x32xf32>
    %15 = tpu.matmul %13, %14, %cst_10 {dimension_numbers = #tpu.dot_dimension_numbers<[1], [0], [0], [1], [0, 0, 1, 1], [], []>} : vector<16x64xf32>, vector<64x32xf32>, vector<16x32xf32> -> vector<16x32xf32>
    %c0_11 = arith.constant 0 : index
    %c0_12 = arith.constant 0 : index
    %16 = vector.load %arg5[%c0_11, %c0_12] : memref<1x32xf32, #tpu.memory_space<vmem>>, vector<1x32xf32>
    %17 = vector.broadcast %16 : vector<1x32xf32> to vector<16x32xf32>
    %18 = arith.addf %15, %17 : vector<16x32xf32>
    %c0_13 = arith.constant 0 : index
    %c0_14 = arith.constant 0 : index
    %19 = vector.load %arg6[%c0_13, %c0_14] : memref<16x32xf32, #tpu.memory_space<vmem>>, vector<16x32xf32>
    tpu.vector_store %arg6[%c0_13, %c0_14], %18 {strides = array<i32>} : memref<16x32xf32, #tpu.memory_space<vmem>>, vector<16x32xf32>,
    return
  }
  func.func @transform_0(%arg0: i32) -> (i32, i32) {
    %c0_i32 = arith.constant 0 : i32
    %c0_i32_0 = arith.constant 0 : i32
    return %arg0, %c0_i32 : i32, i32
  }
  func.func @transform_1(%arg0: i32) -> (i32, i32) {
    %c0_i32 = arith.constant 0 : i32
    %c0_i32_0 = arith.constant 0 : i32
    %c0_i32_1 = arith.constant 0 : i32
    return %c0_i32, %c0_i32_0 : i32, i32
  }
  func.func @transform_2(%arg0: i32) -> (i32, i32) {
    %c0_i32 = arith.constant 0 : i32
    %c0_i32_0 = arith.constant 0 : i32
    %c0_i32_1 = arith.constant 0 : i32
    return %c0_i32, %c0_i32_0 : i32, i32
  }
  func.func @transform_3(%arg0: i32) -> (i32, i32) {
    %c0_i32 = arith.constant 0 : i32
    %c0_i32_0 = arith.constant 0 : i32
    %c0_i32_1 = arith.constant 0 : i32
    return %c0_i32, %c0_i32_0 : i32, i32
  }
  func.func @transform_4(%arg0: i32) -> (i32, i32) {
    %c0_i32 = arith.constant 0 : i32
    %c0_i32_0 = arith.constant 0 : i32
    %c0_i32_1 = arith.constant 0 : i32
    return %c0_i32, %c0_i32_0 : i32, i32
  }
  func.func @transform_5(%arg0: i32) -> (i32, i32) {
    %c0_i32 = arith.constant 0 : i32
    %c0_i32_0 = arith.constant 0 : i32
    return %arg0, %c0_i32 : i32, i32
  }
}

module attributes {stable_mosaic.version = 11 : i64} {
  func.func @_ffn_kernel(%arg0: i32, %arg1: memref<16x32xf32, #tpu.memory_space<vmem>>, %arg2: memref<32x64xf32, #tpu.memory_space<vmem>>, %arg3: memref<1x64xf32, #tpu.memory_space<vmem>>, %arg4: memref<64x32xf32, #tpu.memory_space<vmem>>, %arg5: memref<1x32xf32, #tpu.memory_space<vmem>>, %arg6: memref<16x32xf32, #tpu.memory_space<vmem>>) attributes {dimension_semantics = [#tpu.dimension_semantics<parallel>], iteration_bounds = array<i64: 1>, scalar_prefetch = 0 : i64, scratch_operands = 0 : i64, tpu.core_type = #tpu.core_type<tc>, window_params = [{transform_indices = @transform_0, window_bounds = array<i64: 16, 32>}, {pipeline_mode = #tpu.pipeline_mode<synchronous>, transform_indices = @transform_1, window_bounds = array<i64: 32, 64>}, {pipeline_mode = #tpu.pipeline_mode<synchronous>, transform_indices = @transform_2, window_bounds = array<i64: 1, 64>}, {pipeline_mode = #tpu.pipeline_mode<synchronous>, transform_indices = @transform_3, window_bounds = array<i64: 64, 32>}, {pipeline_mode = #tpu.pipeline_mode<synchronous>, transform_indices = @transform_4, window_bounds = array<i64: 1, 32>}, {transform_indices = @transform_5, window_bounds = array<i64: 16, 32>}]} {
    %c0 = arith.constant 0 : index
    %c0_0 = arith.constant 0 : index
    %0 = vector.load %arg1[%c0, %c0_0] : memref<16x32xf32, #tpu.memory_space<vmem>>, vector<16x32xf32>
    %c0_1 = arith.constant 0 : index
    %c0_2 = arith.constant 0 : index
    %1 = vector.load %arg2[%c0_1, %c0_2] : memref<32x64xf32, #tpu.memory_space<vmem>>, vector<32x64xf32>
    %cst = arith.constant dense<0.000000e+00> : vector<16x64xf32>
    %2 = tpu.matmul %0, %1, %cst {dimension_numbers = #tpu.dot_dimension_numbers<[1], [0], [0], [1], [0, 0, 1, 1], [], []>} : vector<16x32xf32>, vector<32x64xf32>, vector<16x64xf32> -> vector<16x64xf32>
    %c0_3 = arith.constant 0 : index
    %c0_4 = arith.constant 0 : index
    %3 = vector.load %arg3[%c0_3, %c0_4] : memref<1x64xf32, #tpu.memory_space<vmem>>, vector<1x64xf32>
    %4 = vector.broadcast %3 : vector<1x64xf32> to vector<16x64xf32>
    %5 = arith.addf %2, %4 : vector<16x64xf32>
    %cst_5 = arith.constant 5.000000e-01 : f32
    %6 = vector.broadcast %cst_5 : f32 to vector<16x64xf32>
    %7 = arith.mulf %6, %5 : vector<16x64xf32>
    %cst_6 = arith.constant 0.707106769 : f32
    %8 = vector.broadcast %cst_6 : f32 to vector<16x64xf32>
    %9 = arith.mulf %5, %8 : vector<16x64xf32>
    %10 = math.erf %9 : vector<16x64xf32>
    %cst_7 = arith.constant 1.000000e+00 : f32
    %11 = vector.broadcast %cst_7 : f32 to vector<16x64xf32>
    %12 = arith.addf %11, %10 : vector<16x64xf32>
    %13 = arith.mulf %7, %12 : vector<16x64xf32>
    %c0_8 = arith.constant 0 : index
    %c0_9 = arith.constant 0 : index
    %14 = vector.load %arg4[%c0_8, %c0_9] : memref<64x32xf32, #tpu.memory_space<vmem>>, vector<64x32xf32>
    %cst_10 = arith.constant dense<0.000000e+00> : vector<16x32xf32>
    %15 = tpu.matmul %13, %14, %cst_10 {dimension_numbers = #tpu.dot_dimension_numbers<[1], [0], [0], [1], [0, 0, 1, 1], [], []>} : vector<16x64xf32>, vector<64x32xf32>, vector<16x32xf32> -> vector<16x32xf32>
    %c0_11 = arith.constant 0 : index
    %c0_12 = arith.constant 0 : index
    %16 = vector.load %arg5[%c0_11, %c0_12] : memref<1x32xf32, #tpu.memory_space<vmem>>, vector<1x32xf32>
    %17 = vector.broadcast %16 : vector<1x32xf32> to vector<16x32xf32>
    %18 = arith.addf %15, %17 : vector<16x32xf32>
    %c0_13 = arith.constant 0 : index
    %c0_14 = arith.constant 0 : index
    %19 = vector.load %arg6[%c0_13, %c0_14] : memref<16x32xf32, #tpu.memory_space<vmem>>, vector<16x32xf32>
    tpu.vector_store %arg6[%c0_13, %c0_14], %18 {strides = array<i32>} : memref<16x32xf32, #tpu.memory_space<vmem>>, vector<16x32xf32>,
    return
  }
  func.func @transform_0(%arg0: i32) -> (i32, i32) {
    %c0_i32 = arith.constant 0 : i32
    %c0_i32_0 = arith.constant 0 : i32
    return %arg0, %c0_i32 : i32, i32
  }
  func.func @transform_1(%arg0: i32) -> (i32, i32) {
    %c0_i32 = arith.constant 0 : i32
    %c0_i32_0 = arith.constant 0 : i32
    %c0_i32_1 = arith.constant 0 : i32
    return %c0_i32, %c0_i32_0 : i32, i32
  }
  func.func @transform_2(%arg0: i32) -> (i32, i32) {
    %c0_i32 = arith.constant 0 : i32
    %c0_i32_0 = arith.constant 0 : i32
    %c0_i32_1 = arith.constant 0 : i32
    return %c0_i32, %c0_i32_0 : i32, i32
  }
  func.func @transform_3(%arg0: i32) -> (i32, i32) {
    %c0_i32 = arith.constant 0 : i32
    %c0_i32_0 = arith.constant 0 : i32
    %c0_i32_1 = arith.constant 0 : i32
    return %c0_i32, %c0_i32_0 : i32, i32
  }
  func.func @transform_4(%arg0: i32) -> (i32, i32) {
    %c0_i32 = arith.constant 0 : i32
    %c0_i32_0 = arith.constant 0 : i32
    %c0_i32_1 = arith.constant 0 : i32
    return %c0_i32, %c0_i32_0 : i32, i32
  }
  func.func @transform_5(%arg0: i32) -> (i32, i32) {
    %c0_i32 = arith.constant 0 : i32
    %c0_i32_0 = arith.constant 0 : i32
    return %arg0, %c0_i32 : i32, i32
  }
}

</mosaic_0001>

<llo_original>
// kernel: tpu_custom_call.1
$region0: #{tpu_custom_call.1}
  #allocation0 [shape = 'u32[]', space=smem, size = 0x4, offset = 0x4, fixed_abs, tag = 'smem constant byte address 0x4 - core index']
  #allocation1 [shape = 'u32[72,128]{1,0:T(1,128)}', space=vmem, size = 0x9000, scoped, tag = 'internal scratch']
  %s0 = inlined_call_operand.vmem [shape: f32[16,32], index: 0, kind: input, shape index: {}]
  %s1 = inlined_call_operand.vmem [shape: f32[32,64], index: 1, kind: input, shape index: {}]
  %s2 = inlined_call_operand.vmem [shape: f32[1,64], index: 2, kind: input, shape index: {}]
  %s3 = inlined_call_operand.vmem [shape: f32[64,32], index: 3, kind: input, shape index: {}]
  %s4 = inlined_call_operand.vmem [shape: f32[1,32], index: 4, kind: input, shape index: {}]
  %s5 = inlined_call_operand.hbm [shape: f32[16,32], index: 5, kind: output, shape index: {}]
  %s6 = sld [smem:[#allocation0]]
  $region30: #{tpu_custom_call.1} parent=0
    _
  %s8 = ssub.s32 1, %s6
  %s9 = scalar_select 0, %s8, %s6
  $region1: #{tpu_custom_call.1} parent=0
    #allocation2 [shape = 'u8[8192]{0}', space=vmem, size = 0x2000, scoped, tag = 'output window, operand 0, single buffered']
    #allocation3 [shape = 's32[1]{0}', space=sflag, size = 0x4, scoped, tag = 'scoped memory for tpu_custom_call.1']
    %10 = vsyncpa [#allocation3], 0
    // Predicated region
    $region2: #{tpu_custom_call.1} parent=1 // pred_check
      _
    $region3: #{tpu_custom_call.1} parent=1 // pred_check_branch
      %12 = sbr.rel (0) target = $region5
    $region4: #{tpu_custom_call.1} parent=1 // pred_region
      _
    $region5: #{tpu_custom_call.1} parent=1 // pred_fallthru
      _
    // Predicated region
    $region6: #{tpu_custom_call.1} parent=1 // pred_check
      _
    $region7: #{tpu_custom_call.1} parent=1 // pred_check_branch
      %14 = sbr.rel (0) target = $region9
    $region8: #{tpu_custom_call.1} parent=1 // pred_region
      _
    $region9: #{tpu_custom_call.1} parent=1 // pred_fallthru
      _
    // Predicated region
    $region10: #{tpu_custom_call.1} parent=1 // pred_check
      _
    $region11: #{tpu_custom_call.1} parent=1 // pred_check_branch
      %16 = sbr.rel (0) target = $region13
    $region12: #{tpu_custom_call.1} parent=1 // pred_region
      _
    $region13: #{tpu_custom_call.1} parent=1 // pred_fallthru
      _
    // Predicated region
    $region14: #{tpu_custom_call.1} parent=1 // pred_check
      _
    $region15: #{tpu_custom_call.1} parent=1 // pred_check_branch
      %18 = sbr.rel (0) target = $region17
    $region16: #{tpu_custom_call.1} parent=1 // pred_region
      _
    $region17: #{tpu_custom_call.1} parent=1 // pred_fallthru
      _
    // Predicated region
    $region18: #{tpu_custom_call.1} parent=1 // pred_check
      _
    $region19: #{tpu_custom_call.1} parent=1 // pred_check_branch
      %20 = sbr.rel (0) target = $region21
    $region20: #{tpu_custom_call.1} parent=1 // pred_region
      _
    $region21: #{tpu_custom_call.1} parent=1 // pred_fallthru
      _
    %v21 = vld [vmem:[%s0] sm:$0xff]
    %v22 = vld [vmem:[%s0 + $0x8] sm:$0xff]
    %v23 = vld [vmem:[%s1] sm:$0xff]
    %v24 = vld [vmem:[%s1 + $0x8] sm:$0xff]
    %v25 = vld [vmem:[%s1 + $0x10] sm:$0xff]
    %v26 = vld [vmem:[%s1 + $0x18] sm:$0xff]
    %v27 = vld [vmem:[%s2] sm:$0x1]
    %v29 = vperm.slane %v27, 0
    %vm31 = vcmask 261120
    %v33 = vsel %vm31, %v21, 0
    %v36 = vsel %vm31, %v22, 0
    %38 = vmatpush.msra.mxu0 0.0
    %39 = vmatpush.msra.mxu0 0.0
    %40 = vmatpush.msra.mxu0 0.0
    %41 = vmatpush.msra.mxu0 0.0
    %42 = vmatpush.msra.mxu0 0.0
    %43 = vmatpush.msra.mxu0 0.0
    %44 = vmatpush.msra.mxu0 0.0
    %45 = vmatpush.msra.mxu0 0.0
    %46 = vmatpush.msra.mxu0 0.0
    %47 = vmatpush.msra.mxu0 0.0
    %48 = vmatpush.msra.mxu0 0.0
    %49 = vmatpush.msra.mxu0 0.0
    %50 = vmatpush.msra.mxu0 %v26
    %51 = vmatpush.msra.mxu0 %v25
    %52 = vmatpush.msra.mxu0 %v24
    %53 = vmatpush.msra.mxu0 %v23
    %54 = vmatmul.f32.gmra.mxu0 %v33
    %v55 = vpop.f32.mrf.mxu0
    %v56 = vadd.f32 %v29, %v55
    %57 = vmatmul.f32.gmra.mxu0 %v36
    %v58 = vpop.f32.mrf.mxu0
    %v59 = vadd.f32 %v29, %v58
    %60 = vdwg.mxu0
    %v61 = vmul.f32 %v56, 0.5
    %v62 = vmul.f32 %v59, 0.5
    %v63 = vmul.f32 %v56, 0.70710677
    %v64 = vmul.f32 %v59, 0.70710677
    %v65 = vmul.f32 %v63, %v63
    %v66 = vmin.f32 16.0, %v65
    %v67 = vmul.f32 %v66, 2.1237322e-06
    %v68 = vadd.f32 %v67, 0.00028619796
    %v69 = vmul.f32 %v66, %v68
    %v70 = vadd.f32 %v69, 0.0036580483
    %v71 = vmul.f32 %v66, %v70
    %v72 = vadd.f32 %v71, 0.05243302
    %v73 = vmul.f32 %v66, %v72
    %v74 = vadd.f32 %v73, 0.18741608
    %v75 = vmul.f32 %v66, %v74
    %v76 = vadd.f32 %v75, 1.1283791
    %v77 = vmul.f32 %v63, %v76
    %v78 = vmul.f32 %v66, 3.8918573e-05
    %v79 = vadd.f32 %v78, 0.001143296
    %v80 = vmul.f32 %v66, %v79
    %v81 = vadd.f32 %v80, 0.014752088
    %v82 = vmul.f32 %v66, %v81
    %v83 = vadd.f32 %v82, 0.112945676
    %v84 = vmul.f32 %v66, %v83
    %v85 = vadd.f32 %v84, 0.4994258
    %v86 = vmul.f32 %v66, %v85
    %v87 = vadd.f32 %v86, 1.0
    %v88 = vrcp.pop %v87
    %v89 = vmul.f32 %v87, %v88
    %v90 = vsub.f32 1.0, %v89
    %v91 = vmul.f32 %v88, %v90
    %v92 = vadd.f32 %v88, %v91
    %vm93 = vweird.f32 %v87
    %vm94 = vweird.f32 %v88
    %vm95 = vmor %vm93, %vm94
    %v96 = vsel %vm95, %v88, %v92
    %v97 = vand.u32 2147483647, %v87
    %vm98 = vcmp.eq.f32.partialorder %v97, 8.507059e+37
    %v99 = vand.u32 %v87, 2147483648
    %v100 = vor.u32 1.1754944e-38, %v99
    %v101 = vsel %vm98, %v100, %v96
    %v102 = vmul.f32 %v77, %v101
    %v103 = vmin.f32 %v102, 1.0
    %v104 = vmax.f32 %v103, -1.0
    %v105 = vmul.f32 %v64, %v64
    %v106 = vmin.f32 16.0, %v105
    %v107 = vmul.f32 %v106, 2.1237322e-06
    %v108 = vadd.f32 %v107, 0.00028619796
    %v109 = vmul.f32 %v106, %v108
    %v110 = vadd.f32 %v109, 0.0036580483
    %v111 = vmul.f32 %v106, %v110
    %v112 = vadd.f32 %v111, 0.05243302
    %v113 = vmul.f32 %v106, %v112
    %v114 = vadd.f32 %v113, 0.18741608
    %v115 = vmul.f32 %v106, %v114
    %v116 = vadd.f32 %v115, 1.1283791
    %v117 = vmul.f32 %v64, %v116
    %v118 = vmul.f32 %v106, 3.8918573e-05
    %v119 = vadd.f32 %v118, 0.001143296
    %v120 = vmul.f32 %v106, %v119
    %v121 = vadd.f32 %v120, 0.014752088
    %v122 = vmul.f32 %v106, %v121
    %v123 = vadd.f32 %v122, 0.112945676
    %v124 = vmul.f32 %v106, %v123
    %v125 = vadd.f32 %v124, 0.4994258
    %v126 = vmul.f32 %v106, %v125
    %v127 = vadd.f32 %v126, 1.0
    %v128 = vrcp.pop %v127
    %v129 = vmul.f32 %v127, %v128
    %v130 = vsub.f32 1.0, %v129
    %v131 = vmul.f32 %v128, %v130
    %v132 = vadd.f32 %v128, %v131
    %vm133 = vweird.f32 %v127
    %vm134 = vweird.f32 %v128
    %vm135 = vmor %vm133, %vm134
    %v136 = vsel %vm135, %v128, %v132
    %v137 = vand.u32 2147483647, %v127
    %vm138 = vcmp.eq.f32.partialorder %v137, 8.507059e+37
    %v139 = vand.u32 %v127, 2147483648
    %v140 = vor.u32 1.1754944e-38, %v139
    %v141 = vsel %vm138, %v140, %v136
    %v142 = vmul.f32 %v117, %v141
    %v143 = vmin.f32 %v142, 1.0
    %v144 = vmax.f32 %v143, -1.0
    %v145 = vadd.f32 %v104, 1.0
    %v146 = vadd.f32 %v144, 1.0
    %v147 = vmul.f32 %v61, %v145
    %v148 = vmul.f32 %v62, %v146
    %v149 = vld [vmem:[%s3] sm:$0xff]
    %v150 = vld [vmem:[%s3 + $0x8] sm:$0xff]
    %v151 = vld [vmem:[%s3 + $0x10] sm:$0xff]
    %v152 = vld [vmem:[%s3 + $0x18] sm:$0xff]
    %v153 = vld [vmem:[%s3 + $0x20] sm:$0xff]
    %v154 = vld [vmem:[%s3 + $0x28] sm:$0xff]
    %v155 = vld [vmem:[%s3 + $0x30] sm:$0xff]
    %v156 = vld [vmem:[%s3 + $0x38] sm:$0xff]
    %v157 = vld [vmem:[%s4] sm:$0x1]
    %v159 = vperm.slane %v157, 0
    %vm161 = vcmask 523264
    %v163 = vsel %vm161, %v147, 0
    %v166 = vsel %vm161, %v148, 0
    %168 = vmatpush.msra.mxu0 0.0
    %169 = vmatpush.msra.mxu0 0.0
    %170 = vmatpush.msra.mxu0 0.0
    %171 = vmatpush.msra.mxu0 0.0
    %172 = vmatpush.msra.mxu0 0.0
    %173 = vmatpush.msra.mxu0 0.0
    %174 = vmatpush.msra.mxu0 0.0
    %175 = vmatpush.msra.mxu0 0.0
    %176 = vmatpush.msra.mxu0 %v156
    %177 = vmatpush.msra.mxu0 %v155
    %178 = vmatpush.msra.mxu0 %v154
    %179 = vmatpush.msra.mxu0 %v153
    %180 = vmatpush.msra.mxu0 %v152
    %181 = vmatpush.msra.mxu0 %v151
    %182 = vmatpush.msra.mxu0 %v150
    %183 = vmatpush.msra.mxu0 %v149
    %184 = vmatmul.f32.gmra.mxu0 %v163
    %v185 = vpop.f32.mrf.mxu0
    %v186 = vadd.f32 %v159, %v185
    %187 = vmatmul.f32.gmra.mxu0 %v166
    %v188 = vpop.f32.mrf.mxu0
    %v189 = vadd.f32 %v159, %v188
    %190 = vdwg.mxu0
    %191 = vst.msk [vmem:[#allocation2] sm:$0xff] %vm31, %v186
    %192 = vst.msk [vmem:[#allocation2 + $0x8] sm:$0xff] %vm31, %v189
    // Predicated region
    $region22: #{tpu_custom_call.1} parent=1 // pred_check
      _
    $region23: #{tpu_custom_call.1} parent=1 // pred_check_branch
      %194 = sbr.rel (0) target = $region25
    $region24: #{tpu_custom_call.1} parent=1 // pred_region
      %196 = vsyncadd [#allocation3], 0
      %s197 = sshll.u32 [#allocation2], 4
      %s198 = int_to_ptr.vmem [resolvable:$true] %s197
      %s199 = sshll.u32 %s5, 4
      %s200 = int_to_ptr.hbm [resolvable:$true] %s199
      %205 = dma.vmem_to_hbm [thread:$0]  %s198, 256, %s200, [#allocation3], 128, 128, 8
    $region25: #{tpu_custom_call.1} parent=1 // pred_fallthru
      _
    // Predicated region
    $region26: #{tpu_custom_call.1} parent=1 // pred_check
      _
    $region27: #{tpu_custom_call.1} parent=1 // pred_check_branch
      %207 = sbr.rel (0) target = $region29
    $region28: #{tpu_custom_call.1} parent=1 // pred_region
      %209 = dma.done [#allocation3], 256
    $region29: #{tpu_custom_call.1} parent=1 // pred_fallthru
      _
    %210 = vsyncpa [#allocation3], 1

// kernel: tpu_custom_call.1
$region0: #{tpu_custom_call.1}
  #allocation0 [shape = 'u32[]', space=smem, size = 0x4, offset = 0x4, fixed_abs, tag = 'smem constant byte address 0x4 - core index']
  #allocation1 [shape = 'u32[72,128]{1,0:T(1,128)}', space=vmem, size = 0x9000, scoped, tag = 'internal scratch']
  %s0 = inlined_call_operand.vmem [shape: f32[16,32], index: 0, kind: input, shape index: {}]
  %s1 = inlined_call_operand.vmem [shape: f32[32,64], index: 1, kind: input, shape index: {}]
  %s2 = inlined_call_operand.vmem [shape: f32[1,64], index: 2, kind: input, shape index: {}]
  %s3 = inlined_call_operand.vmem [shape: f32[64,32], index: 3, kind: input, shape index: {}]
  %s4 = inlined_call_operand.vmem [shape: f32[1,32], index: 4, kind: input, shape index: {}]
  %s5 = inlined_call_operand.hbm [shape: f32[16,32], index: 5, kind: output, shape index: {}]
  %s6 = sld [smem:[#allocation0]]
  $region30: #{tpu_custom_call.1} parent=0
    _
  %s8 = ssub.s32 1, %s6
  %s9 = scalar_select 0, %s8, %s6
  $region1: #{tpu_custom_call.1} parent=0
    #allocation2 [shape = 'u8[8192]{0}', space=vmem, size = 0x2000, scoped, tag = 'output window, operand 0, single buffered']
    #allocation3 [shape = 's32[1]{0}', space=sflag, size = 0x4, scoped, tag = 'scoped memory for tpu_custom_call.1']
    %10 = vsyncpa [#allocation3], 0
    // Predicated region
    $region2: #{tpu_custom_call.1} parent=1 // pred_check
      _
    $region3: #{tpu_custom_call.1} parent=1 // pred_check_branch
      %12 = sbr.rel (0) target = $region5
    $region4: #{tpu_custom_call.1} parent=1 // pred_region
      _
    $region5: #{tpu_custom_call.1} parent=1 // pred_fallthru
      _
    // Predicated region
    $region6: #{tpu_custom_call.1} parent=1 // pred_check
      _
    $region7: #{tpu_custom_call.1} parent=1 // pred_check_branch
      %14 = sbr.rel (0) target = $region9
    $region8: #{tpu_custom_call.1} parent=1 // pred_region
      _
    $region9: #{tpu_custom_call.1} parent=1 // pred_fallthru
      _
    // Predicated region
    $region10: #{tpu_custom_call.1} parent=1 // pred_check
      _
    $region11: #{tpu_custom_call.1} parent=1 // pred_check_branch
      %16 = sbr.rel (0) target = $region13
    $region12: #{tpu_custom_call.1} parent=1 // pred_region
      _
    $region13: #{tpu_custom_call.1} parent=1 // pred_fallthru
      _
    // Predicated region
    $region14: #{tpu_custom_call.1} parent=1 // pred_check
      _
    $region15: #{tpu_custom_call.1} parent=1 // pred_check_branch
      %18 = sbr.rel (0) target = $region17
    $region16: #{tpu_custom_call.1} parent=1 // pred_region
      _
    $region17: #{tpu_custom_call.1} parent=1 // pred_fallthru
      _
    // Predicated region
    $region18: #{tpu_custom_call.1} parent=1 // pred_check
      _
    $region19: #{tpu_custom_call.1} parent=1 // pred_check_branch
      %20 = sbr.rel (0) target = $region21
    $region20: #{tpu_custom_call.1} parent=1 // pred_region
      _
    $region21: #{tpu_custom_call.1} parent=1 // pred_fallthru
      _
    %v21 = vld [vmem:[%s0] sm:$0xff]
    %v22 = vld [vmem:[%s0 + $0x8] sm:$0xff]
    %v23 = vld [vmem:[%s1] sm:$0xff]
    %v24 = vld [vmem:[%s1 + $0x8] sm:$0xff]
    %v25 = vld [vmem:[%s1 + $0x10] sm:$0xff]
    %v26 = vld [vmem:[%s1 + $0x18] sm:$0xff]
    %v27 = vld [vmem:[%s2] sm:$0x1]
    %v29 = vperm.slane %v27, 0
    %vm31 = vcmask 261120
    %v33 = vsel %vm31, %v21, 0
    %v36 = vsel %vm31, %v22, 0
    %38 = vmatpush.msra.mxu0 0.0
    %39 = vmatpush.msra.mxu0 0.0
    %40 = vmatpush.msra.mxu0 0.0
    %41 = vmatpush.msra.mxu0 0.0
    %42 = vmatpush.msra.mxu0 0.0
    %43 = vmatpush.msra.mxu0 0.0
    %44 = vmatpush.msra.mxu0 0.0
    %45 = vmatpush.msra.mxu0 0.0
    %46 = vmatpush.msra.mxu0 0.0
    %47 = vmatpush.msra.mxu0 0.0
    %48 = vmatpush.msra.mxu0 0.0
    %49 = vmatpush.msra.mxu0 0.0
    %50 = vmatpush.msra.mxu0 %v26
    %51 = vmatpush.msra.mxu0 %v25
    %52 = vmatpush.msra.mxu0 %v24
    %53 = vmatpush.msra.mxu0 %v23
    %54 = vmatmul.f32.gmra.mxu0 %v33
    %v55 = vpop.f32.mrf.mxu0
    %v56 = vadd.f32 %v29, %v55
    %57 = vmatmul.f32.gmra.mxu0 %v36
    %v58 = vpop.f32.mrf.mxu0
    %v59 = vadd.f32 %v29, %v58
    %60 = vdwg.mxu0
    %v61 = vmul.f32 %v56, 0.5
    %v62 = vmul.f32 %v59, 0.5
    %v63 = vmul.f32 %v56, 0.70710677
    %v64 = vmul.f32 %v59, 0.70710677
    %v65 = vmul.f32 %v63, %v63
    %v66 = vmin.f32 16.0, %v65
    %v67 = vmul.f32 %v66, 2.1237322e-06
    %v68 = vadd.f32 %v67, 0.00028619796
    %v69 = vmul.f32 %v66, %v68
    %v70 = vadd.f32 %v69, 0.0036580483
    %v71 = vmul.f32 %v66, %v70
    %v72 = vadd.f32 %v71, 0.05243302
    %v73 = vmul.f32 %v66, %v72
    %v74 = vadd.f32 %v73, 0.18741608
    %v75 = vmul.f32 %v66, %v74
    %v76 = vadd.f32 %v75, 1.1283791
    %v77 = vmul.f32 %v63, %v76
    %v78 = vmul.f32 %v66, 3.8918573e-05
    %v79 = vadd.f32 %v78, 0.001143296
    %v80 = vmul.f32 %v66, %v79
    %v81 = vadd.f32 %v80, 0.014752088
    %v82 = vmul.f32 %v66, %v81
    %v83 = vadd.f32 %v82, 0.112945676
    %v84 = vmul.f32 %v66, %v83
    %v85 = vadd.f32 %v84, 0.4994258
    %v86 = vmul.f32 %v66, %v85
    %v87 = vadd.f32 %v86, 1.0
    %v88 = vrcp.pop %v87
    %v89 = vmul.f32 %v87, %v88
    %v90 = vsub.f32 1.0, %v89
    %v91 = vmul.f32 %v88, %v90
    %v92 = vadd.f32 %v88, %v91
    %vm93 = vweird.f32 %v87
    %vm94 = vweird.f32 %v88
    %vm95 = vmor %vm93, %vm94
    %v96 = vsel %vm95, %v88, %v92
    %v97 = vand.u32 2147483647, %v87
    %vm98 = vcmp.eq.f32.partialorder %v97, 8.507059e+37
    %v99 = vand.u32 %v87, 2147483648
    %v100 = vor.u32 1.1754944e-38, %v99
    %v101 = vsel %vm98, %v100, %v96
    %v102 = vmul.f32 %v77, %v101
    %v103 = vmin.f32 %v102, 1.0
    %v104 = vmax.f32 %v103, -1.0
    %v105 = vmul.f32 %v64, %v64
    %v106 = vmin.f32 16.0, %v105
    %v107 = vmul.f32 %v106, 2.1237322e-06
    %v108 = vadd.f32 %v107, 0.00028619796
    %v109 = vmul.f32 %v106, %v108
    %v110 = vadd.f32 %v109, 0.0036580483
    %v111 = vmul.f32 %v106, %v110
    %v112 = vadd.f32 %v111, 0.05243302
    %v113 = vmul.f32 %v106, %v112
    %v114 = vadd.f32 %v113, 0.18741608
    %v115 = vmul.f32 %v106, %v114
    %v116 = vadd.f32 %v115, 1.1283791
    %v117 = vmul.f32 %v64, %v116
    %v118 = vmul.f32 %v106, 3.8918573e-05
    %v119 = vadd.f32 %v118, 0.001143296
    %v120 = vmul.f32 %v106, %v119
    %v121 = vadd.f32 %v120, 0.014752088
    %v122 = vmul.f32 %v106, %v121
    %v123 = vadd.f32 %v122, 0.112945676
    %v124 = vmul.f32 %v106, %v123
    %v125 = vadd.f32 %v124, 0.4994258
    %v126 = vmul.f32 %v106, %v125
    %v127 = vadd.f32 %v126, 1.0
    %v128 = vrcp.pop %v127
    %v129 = vmul.f32 %v127, %v128
    %v130 = vsub.f32 1.0, %v129
    %v131 = vmul.f32 %v128, %v130
    %v132 = vadd.f32 %v128, %v131
    %vm133 = vweird.f32 %v127
    %vm134 = vweird.f32 %v128
    %vm135 = vmor %vm133, %vm134
    %v136 = vsel %vm135, %v128, %v132
    %v137 = vand.u32 2147483647, %v127
    %vm138 = vcmp.eq.f32.partialorder %v137, 8.507059e+37
    %v139 = vand.u32 %v127, 2147483648
    %v140 = vor.u32 1.1754944e-38, %v139
    %v141 = vsel %vm138, %v140, %v136
    %v142 = vmul.f32 %v117, %v141
    %v143 = vmin.f32 %v142, 1.0
    %v144 = vmax.f32 %v143, -1.0
    %v145 = vadd.f32 %v104, 1.0
    %v146 = vadd.f32 %v144, 1.0
    %v147 = vmul.f32 %v61, %v145
    %v148 = vmul.f32 %v62, %v146
    %v149 = vld [vmem:[%s3] sm:$0xff]
    %v150 = vld [vmem:[%s3 + $0x8] sm:$0xff]
    %v151 = vld [vmem:[%s3 + $0x10] sm:$0xff]
    %v152 = vld [vmem:[%s3 + $0x18] sm:$0xff]
    %v153 = vld [vmem:[%s3 + $0x20] sm:$0xff]
    %v154 = vld [vmem:[%s3 + $0x28] sm:$0xff]
    %v155 = vld [vmem:[%s3 + $0x30] sm:$0xff]
    %v156 = vld [vmem:[%s3 + $0x38] sm:$0xff]
    %v157 = vld [vmem:[%s4] sm:$0x1]
    %v159 = vperm.slane %v157, 0
    %vm161 = vcmask 523264
    %v163 = vsel %vm161, %v147, 0
    %v166 = vsel %vm161, %v148, 0
    %168 = vmatpush.msra.mxu0 0.0
    %169 = vmatpush.msra.mxu0 0.0
    %170 = vmatpush.msra.mxu0 0.0
    %171 = vmatpush.msra.mxu0 0.0
    %172 = vmatpush.msra.mxu0 0.0
    %173 = vmatpush.msra.mxu0 0.0
    %174 = vmatpush.msra.mxu0 0.0
    %175 = vmatpush.msra.mxu0 0.0
    %176 = vmatpush.msra.mxu0 %v156
    %177 = vmatpush.msra.mxu0 %v155
    %178 = vmatpush.msra.mxu0 %v154
    %179 = vmatpush.msra.mxu0 %v153
    %180 = vmatpush.msra.mxu0 %v152
    %181 = vmatpush.msra.mxu0 %v151
    %182 = vmatpush.msra.mxu0 %v150
    %183 = vmatpush.msra.mxu0 %v149
    %184 = vmatmul.f32.gmra.mxu0 %v163
    %v185 = vpop.f32.mrf.mxu0
    %v186 = vadd.f32 %v159, %v185
    %187 = vmatmul.f32.gmra.mxu0 %v166
    %v188 = vpop.f32.mrf.mxu0
    %v189 = vadd.f32 %v159, %v188
    %190 = vdwg.mxu0
    %191 = vst.msk [vmem:[#allocation2] sm:$0xff] %vm31, %v186
    %192 = vst.msk [vmem:[#allocation2 + $0x8] sm:$0xff] %vm31, %v189
    // Predicated region
    $region22: #{tpu_custom_call.1} parent=1 // pred_check
      _
    $region23: #{tpu_custom_call.1} parent=1 // pred_check_branch
      %194 = sbr.rel (0) target = $region25
    $region24: #{tpu_custom_call.1} parent=1 // pred_region
      %196 = vsyncadd [#allocation3], 0
      %s197 = sshll.u32 [#allocation2], 4
      %s198 = int_to_ptr.vmem [resolvable:$true] %s197
      %s199 = sshll.u32 %s5, 4
      %s200 = int_to_ptr.hbm [resolvable:$true] %s199
      %205 = dma.vmem_to_hbm [thread:$0]  %s198, 256, %s200, [#allocation3], 128, 128, 8
    $region25: #{tpu_custom_call.1} parent=1 // pred_fallthru
      _
    // Predicated region
    $region26: #{tpu_custom_call.1} parent=1 // pred_check
      _
    $region27: #{tpu_custom_call.1} parent=1 // pred_check_branch
      %207 = sbr.rel (0) target = $region29
    $region28: #{tpu_custom_call.1} parent=1 // pred_region
      %209 = dma.done [#allocation3], 256
    $region29: #{tpu_custom_call.1} parent=1 // pred_fallthru
      _
    %210 = vsyncpa [#allocation3], 1

</llo_original>
